<compile_context>
chip_gen: v7x
topology: tpu7x:2x2x1
jax: 0.10.0
libtpu: 0.0.40
codegen_flags: <defaults>
</compile_context>

<pallas_src>
import functools
import math

import jax
import jax.numpy as jnp
from jax.experimental import pallas as pl
from jax.experimental.pallas import tpu as pltpu

EMBEDDING_SIZE = 500          # from the module's __init__
E_PAD = 512                   # lane/MXU-friendly padded embedding width
NUM_FILTERS = 10              # from the module's __init__
WINDOW_SIZES = (1, 2, 3, 5)   # from the module's __init__
MAX_PAD = max(WINDOW_SIZES) - 1                    # 4
NTOT = sum(WINDOW_SIZES) * NUM_FILTERS             # 110 concatenated conv taps
NW = len(WINDOW_SIZES)


# ---------------------------------------------------------------------------
# Single fused kernel: conv(all windows) + bias + tanh + max-pool + linear
#                      + softmax for one batch tile.
# ---------------------------------------------------------------------------
def _fused_cnn_kernel(emb_ref, wall_ref, ball_ref, lw_ref, lb_ref, out_ref,
                      *, tb, lp, seq_len, windows, nf):
    # emb_ref:  (TB*Lp, E_PAD) bf16  padded-gathered embeddings for this tile
    # wall_ref: (E_PAD, NTOT)  bf16  all conv taps concatenated on the out axis
    # ball_ref: (NW, 1, F)     f32   per-window conv bias
    # lw_ref:   (NW*F, C)      f32   linear weight
    # lb_ref:   (1, C)         f32   linear bias
    # out_ref:  (TB, C)        f32   softmax probabilities
    max_pad = max(windows) - 1

    # One big MXU pass covering every window/tap at once, f32 accumulate.
    p = jnp.dot(emb_ref[...], wall_ref[...],
                preferred_element_type=jnp.float32)      # (TB*Lp, NTOT)
    p = p.reshape(tb, lp, NTOT)                          # (TB, Lp, NTOT)

    bias = ball_ref[...]                                 # (NW, 1, F)
    pooled = []
    col = 0
    for wi, w in enumerate(windows):
        out_len = seq_len + w - 1                        # PyTorch conv out length
        start = max_pad - (w - 1)                        # offset into max-padded seq
        # conv_w[b, t, f] = sum_dw P[b, t+dw+start, col + dw*F + f]
        acc = p[:, start:start + out_len, col:col + nf]
        for dw in range(1, w):
            acc = acc + p[:, start + dw:start + dw + out_len,
                          col + dw * nf:col + (dw + 1) * nf]
        act = jnp.tanh(acc + bias[wi])                   # (TB, out_len, F), f32
        pooled.append(jnp.max(act, axis=1))              # max_pool1d over full T
        col += w * nf

    feat = jnp.concatenate(pooled, axis=1)               # (TB, NW*F)
    logits = jnp.dot(feat, lw_ref[...],
                     preferred_element_type=jnp.float32) + lb_ref[...]
    m = jnp.max(logits, axis=1, keepdims=True)
    e = jnp.exp(logits - m)
    out_ref[...] = e / jnp.sum(e, axis=1, keepdims=True)


# ---------------------------------------------------------------------------
# Forward wrapper: embedding gather (glue, plain JAX) + one pallas_call.
# ---------------------------------------------------------------------------
def cnn_forward(params, tokens, *, max_batch_tile=64):
    emb_tab = params["embedding"]                 # (V+1, E_PAD) bf16, last row = 0
    B, L = tokens.shape
    pad_idx = emb_tab.shape[0] - 1                # the all-zero padding row
    C = params["linear_w"].shape[1]
    lp = L + 2 * MAX_PAD

    # Batch tile: whole batch if small, else a multiple-of-8 tile (sublane clean).
    tb = B if B <= max_batch_tile else max_batch_tile
    bp = -(-B // tb) * tb                         # batch padded to a tile multiple

    # Pad time (both sides, max window) and batch with the zero-embedding index so
    # a single gather directly produces the padded activation -- no jnp.pad of
    # the big (B, L, E) array, no per-window padded HBM copies.
    tok = jnp.pad(tokens, ((0, bp - B), (MAX_PAD, MAX_PAD)),
                  constant_values=pad_idx)
    emb2d = jnp.take(emb_tab, tok.reshape(-1), axis=0)       # (bp*lp, E_PAD) bf16

    # Concatenate all conv taps: columns [offset(w) + dw*F + f] <- conv{w}_w[dw,:,f]
    wall = jnp.concatenate(
        [jnp.transpose(params[f"conv{w}_w"], (1, 0, 2)).reshape(E_PAD, w * NUM_FILTERS)
         for w in WINDOW_SIZES], axis=1)                     # (E_PAD, NTOT) bf16
    ball = jnp.stack([params[f"conv{w}_b"] for w in WINDOW_SIZES],
                     axis=0).reshape(NW, 1, NUM_FILTERS)     # (NW, 1, F) f32

    kernel = functools.partial(_fused_cnn_kernel, tb=tb, lp=lp, seq_len=L,
                               windows=WINDOW_SIZES, nf=NUM_FILTERS)
    out = pl.pallas_call(
        kernel,
        out_shape=jax.ShapeDtypeStruct((bp, C), jnp.float32),
        grid=(bp // tb,),
        in_specs=[
            pl.BlockSpec((tb * lp, E_PAD), lambda b: (b, 0)),
            pl.BlockSpec((E_PAD, NTOT), lambda b: (0, 0)),
            pl.BlockSpec((NW, 1, NUM_FILTERS), lambda b: (0, 0, 0)),
            pl.BlockSpec((NW * NUM_FILTERS, C), lambda b: (0, 0)),
            pl.BlockSpec((1, C), lambda b: (0, 0)),
        ],
        out_specs=pl.BlockSpec((tb, C), lambda b: (b, 0)),
        compiler_params=pltpu.CompilerParams(
            dimension_semantics=("parallel",)),
    )(emb2d, wall, ball, params["linear_w"], params["linear_b"].reshape(1, C))
    return out[:B]


# ---------------------------------------------------------------------------
# Pure-JAX reference (PyTorch semantics) for a correctness sanity check.
# ---------------------------------------------------------------------------
def reference_forward(params, tokens):
    L = tokens.shape[1]
    emb_tab = params["embedding"].astype(jnp.float32)
    emb = jnp.take(emb_tab, tokens, axis=0)                  # (B, L, E_PAD)
    feats = []
    for w in WINDOW_SIZES:
        wmat = params[f"conv{w}_w"].astype(jnp.float32)      # (w, E_PAD, F)
        pad = jnp.pad(emb, ((0, 0), (w - 1, w - 1), (0, 0)))
        T = L + w - 1
        conv = sum(jnp.einsum("ble,ef->blf", pad[:, dw:dw + T, :], wmat[dw])
                   for dw in range(w))
        act = jnp.tanh(conv + params[f"conv{w}_b"])
        feats.append(jnp.max(act, axis=1))
    feat = jnp.concatenate(feats, axis=1)
    logits = feat @ params["linear_w"] + params["linear_b"]
    return jax.nn.softmax(logits, axis=1)


def init_params(key, vocab_size, num_classes):
    params = {}
    keys = jax.random.split(key, 2 * NW + 3)
    emb = 0.1 * jax.random.normal(keys[0], (vocab_size, EMBEDDING_SIZE), jnp.float32)
    # extra zero row (sequence padding index) + zero columns to E_PAD
    emb = jnp.pad(emb, ((0, 1), (0, E_PAD - EMBEDDING_SIZE)))
    params["embedding"] = emb.astype(jnp.bfloat16)
    for i, w in enumerate(WINDOW_SIZES):
        fan_in = w * EMBEDDING_SIZE
        bound = 1.0 / math.sqrt(fan_in)
        wmat = jax.random.uniform(keys[1 + 2 * i], (w, EMBEDDING_SIZE, NUM_FILTERS),
                                  jnp.float32, -bound, bound)
        wmat = jnp.pad(wmat, ((0, 0), (0, E_PAD - EMBEDDING_SIZE), (0, 0)))
        params[f"conv{w}_w"] = wmat.astype(jnp.bfloat16)
        params[f"conv{w}_b"] = jax.random.uniform(keys[2 + 2 * i], (NUM_FILTERS,),
                                                  jnp.float32, -bound, bound)
    d_in = NUM_FILTERS * NW
    bound = 1.0 / math.sqrt(d_in)
    params["linear_w"] = jax.random.uniform(keys[-2], (d_in, num_classes),
                                            jnp.float32, -bound, bound)
    params["linear_b"] = jax.random.uniform(keys[-1], (num_classes,),
                                            jnp.float32, -bound, bound)
    return params


if __name__ == "__main__":
    B, L, VOCAB, NUM_CLASSES = 2, 8, 50, 5
    key = jax.random.PRNGKey(0)
    k_tok, k_par = jax.random.split(key)
    tokens = jax.random.randint(k_tok, (B, L), 0, VOCAB, dtype=jnp.int32)
    params = init_params(k_par, VOCAB, NUM_CLASSES)

    probs = jax.jit(cnn_forward)(params, tokens)
    probs = jax.block_until_ready(probs)

    assert probs.shape == (B, NUM_CLASSES)
    ref = reference_forward(params, tokens)
    assert jnp.allclose(probs, ref, atol=1e-4, rtol=1e-4), (probs, ref)
    assert jnp.allclose(jnp.sum(probs, axis=1), 1.0, atol=1e-5)
    print("KERNEL_OK")
</pallas_src>

<mosaic_0001>
module attributes {stable_mosaic.version = 11 : i64} {
  func.func @_fused_cnn_kernel(%arg0: i32, %arg1: memref<32x512xbf16, #tpu.memory_space<vmem>>, %arg2: memref<512x110xbf16, #tpu.memory_space<vmem>>, %arg3: memref<4x1x10xf32, #tpu.memory_space<vmem>>, %arg4: memref<40x5xf32, #tpu.memory_space<vmem>>, %arg5: memref<1x5xf32, #tpu.memory_space<vmem>>, %arg6: memref<2x5xf32, #tpu.memory_space<vmem>>) attributes {dimension_semantics = [#tpu.dimension_semantics<parallel>], iteration_bounds = array<i64: 1>, scalar_prefetch = 0 : i64, scratch_operands = 0 : i64, tpu.core_type = #tpu.core_type<tc>, window_params = [{transform_indices = @transform_0, window_bounds = array<i64: 32, 512>}, {pipeline_mode = #tpu.pipeline_mode<synchronous>, transform_indices = @transform_1, window_bounds = array<i64: 512, 110>}, {pipeline_mode = #tpu.pipeline_mode<synchronous>, transform_indices = @transform_2, window_bounds = array<i64: 4, 1, 10>}, {pipeline_mode = #tpu.pipeline_mode<synchronous>, transform_indices = @transform_3, window_bounds = array<i64: 40, 5>}, {pipeline_mode = #tpu.pipeline_mode<synchronous>, transform_indices = @transform_4, window_bounds = array<i64: 1, 5>}, {transform_indices = @transform_5, window_bounds = array<i64: 2, 5>}]} {
    %c0 = arith.constant 0 : index
    %c0_0 = arith.constant 0 : index
    %0 = vector.load %arg1[%c0, %c0_0] : memref<32x512xbf16, #tpu.memory_space<vmem>>, vector<32x512xbf16>
    %c0_1 = arith.constant 0 : index
    %c0_2 = arith.constant 0 : index
    %1 = vector.load %arg2[%c0_1, %c0_2] : memref<512x110xbf16, #tpu.memory_space<vmem>>, vector<512x110xbf16>
    %cst = arith.constant dense<0.000000e+00> : vector<32x110xf32>
    %2 = tpu.matmul %0, %1, %cst {dimension_numbers = #tpu.dot_dimension_numbers<[1], [0], [0], [1], [0, 0, 1, 1], [], []>} : vector<32x512xbf16>, vector<512x110xbf16>, vector<32x110xf32> -> vector<32x110xf32>
    %3 = vector.shape_cast %2 : vector<32x110xf32> to vector<2x16x110xf32>
    %c0_3 = arith.constant 0 : index
    %c0_4 = arith.constant 0 : index
    %c0_5 = arith.constant 0 : index
    %4 = vector.load %arg3[%c0_3, %c0_4, %c0_5] : memref<4x1x10xf32, #tpu.memory_space<vmem>>, vector<4x1x10xf32>
    %5 = vector.extract_strided_slice %3 {offsets = [0, 4, 0], sizes = [2, 8, 10], strides = [1, 1, 1]} : vector<2x16x110xf32> to vector<2x8x10xf32>
    %6 = vector.extract_strided_slice %4 {offsets = [0, 0, 0], sizes = [1, 1, 10], strides = [1, 1, 1]} : vector<4x1x10xf32> to vector<1x1x10xf32>
    %7 = vector.shape_cast %6 : vector<1x1x10xf32> to vector<1x10xf32>
    %8 = vector.shape_cast %7 : vector<1x10xf32> to vector<1x1x10xf32>
    %9 = vector.broadcast %8 : vector<1x1x10xf32> to vector<2x8x10xf32>
    %10 = arith.addf %5, %9 : vector<2x8x10xf32>
    %11 = math.tanh %10 : vector<2x8x10xf32>
    %cst_6 = arith.constant dense<0xFF800000> : vector<2x10xf32>
    %12 = vector.multi_reduction <maximumf>, %11, %cst_6 [1] : vector<2x8x10xf32> to vector<2x10xf32>
    %13 = vector.extract_strided_slice %3 {offsets = [0, 3, 10], sizes = [2, 9, 10], strides = [1, 1, 1]} : vector<2x16x110xf32> to vector<2x9x10xf32>
    %14 = vector.extract_strided_slice %3 {offsets = [0, 4, 20], sizes = [2, 9, 10], strides = [1, 1, 1]} : vector<2x16x110xf32> to vector<2x9x10xf32>
    %15 = arith.addf %13, %14 : vector<2x9x10xf32>
    %16 = vector.extract_strided_slice %4 {offsets = [1, 0, 0], sizes = [1, 1, 10], strides = [1, 1, 1]} : vector<4x1x10xf32> to vector<1x1x10xf32>
    %17 = vector.shape_cast %16 : vector<1x1x10xf32> to vector<1x10xf32>
    %18 = vector.shape_cast %17 : vector<1x10xf32> to vector<1x1x10xf32>
    %19 = vector.broadcast %18 : vector<1x1x10xf32> to vector<2x9x10xf32>
    %20 = arith.addf %15, %19 : vector<2x9x10xf32>
    %21 = math.tanh %20 : vector<2x9x10xf32>
    %cst_7 = arith.constant dense<0xFF800000> : vector<2x10xf32>
    %22 = vector.multi_reduction <maximumf>, %21, %cst_7 [1] : vector<2x9x10xf32> to vector<2x10xf32>
    %23 = vector.extract_strided_slice %3 {offsets = [0, 2, 30], sizes = [2, 10, 10], strides = [1, 1, 1]} : vector<2x16x110xf32> to vector<2x10x10xf32>
    %24 = vector.extract_strided_slice %3 {offsets = [0, 3, 40], sizes = [2, 10, 10], strides = [1, 1, 1]} : vector<2x16x110xf32> to vector<2x10x10xf32>
    %25 = arith.addf %23, %24 : vector<2x10x10xf32>
    %26 = vector.extract_strided_slice %3 {offsets = [0, 4, 50], sizes = [2, 10, 10], strides = [1, 1, 1]} : vector<2x16x110xf32> to vector<2x10x10xf32>
    %27 = arith.addf %25, %26 : vector<2x10x10xf32>
    %28 = vector.extract_strided_slice %4 {offsets = [2, 0, 0], sizes = [1, 1, 10], strides = [1, 1, 1]} : vector<4x1x10xf32> to vector<1x1x10xf32>
    %29 = vector.shape_cast %28 : vector<1x1x10xf32> to vector<1x10xf32>
    %30 = vector.shape_cast %29 : vector<1x10xf32> to vector<1x1x10xf32>
    %31 = vector.broadcast %30 : vector<1x1x10xf32> to vector<2x10x10xf32>
    %32 = arith.addf %27, %31 : vector<2x10x10xf32>
    %33 = math.tanh %32 : vector<2x10x10xf32>
    %cst_8 = arith.constant dense<0xFF800000> : vector<2x10xf32>
    %34 = vector.multi_reduction <maximumf>, %33, %cst_8 [1] : vector<2x10x10xf32> to vector<2x10xf32>
    %35 = vector.extract_strided_slice %3 {offsets = [0, 0, 60], sizes = [2, 12, 10], strides = [1, 1, 1]} : vector<2x16x110xf32> to vector<2x12x10xf32>
    %36 = vector.extract_strided_slice %3 {offsets = [0, 1, 70], sizes = [2, 12, 10], strides = [1, 1, 1]} : vector<2x16x110xf32> to vector<2x12x10xf32>
    %37 = arith.addf %35, %36 : vector<2x12x10xf32>
    %38 = vector.extract_strided_slice %3 {offsets = [0, 2, 80], sizes = [2, 12, 10], strides = [1, 1, 1]} : vector<2x16x110xf32> to vector<2x12x10xf32>
    %39 = arith.addf %37, %38 : vector<2x12x10xf32>
    %40 = vector.extract_strided_slice %3 {offsets = [0, 3, 90], sizes = [2, 12, 10], strides = [1, 1, 1]} : vector<2x16x110xf32> to vector<2x12x10xf32>
    %41 = arith.addf %39, %40 : vector<2x12x10xf32>
    %42 = vector.extract_strided_slice %3 {offsets = [0, 4, 100], sizes = [2, 12, 10], strides = [1, 1, 1]} : vector<2x16x110xf32> to vector<2x12x10xf32>
    %43 = arith.addf %41, %42 : vector<2x12x10xf32>
    %44 = vector.extract_strided_slice %4 {offsets = [3, 0, 0], sizes = [1, 1, 10], strides = [1, 1, 1]} : vector<4x1x10xf32> to vector<1x1x10xf32>
    %45 = vector.shape_cast %44 : vector<1x1x10xf32> to vector<1x10xf32>
    %46 = vector.shape_cast %45 : vector<1x10xf32> to vector<1x1x10xf32>
    %47 = vector.broadcast %46 : vector<1x1x10xf32> to vector<2x12x10xf32>
    %48 = arith.addf %43, %47 : vector<2x12x10xf32>
    %49 = math.tanh %48 : vector<2x12x10xf32>
    %cst_9 = arith.constant dense<0xFF800000> : vector<2x10xf32>
    %50 = vector.multi_reduction <maximumf>, %49, %cst_9 [1] : vector<2x12x10xf32> to vector<2x10xf32>
    %51 = tpu.concatenate %12, %22, %34, %50 in 1 : vector<2x10xf32>, vector<2x10xf32>, vector<2x10xf32>, vector<2x10xf32> -> vector<2x40xf32>
    %c0_10 = arith.constant 0 : index
    %c0_11 = arith.constant 0 : index
    %52 = vector.load %arg4[%c0_10, %c0_11] : memref<40x5xf32, #tpu.memory_space<vmem>>, vector<40x5xf32>
    %cst_12 = arith.constant dense<0.000000e+00> : vector<2x5xf32>
    %53 = tpu.matmul %51, %52, %cst_12 {dimension_numbers = #tpu.dot_dimension_numbers<[1], [0], [0], [1], [0, 0, 1, 1], [], []>} : vector<2x40xf32>, vector<40x5xf32>, vector<2x5xf32> -> vector<2x5xf32>
    %c0_13 = arith.constant 0 : index
    %c0_14 = arith.constant 0 : index
    %54 = vector.load %arg5[%c0_13, %c0_14] : memref<1x5xf32, #tpu.memory_space<vmem>>, vector<1x5xf32>
    %55 = vector.broadcast %54 : vector<1x5xf32> to vector<2x5xf32>
    %56 = arith.addf %53, %55 : vector<2x5xf32>
    %cst_15 = arith.constant dense<0xFF800000> : vector<2xf32>
    %57 = vector.multi_reduction <maximumf>, %56, %cst_15 [1] : vector<2x5xf32> to vector<2xf32>
    %58 = vector.shape_cast %57 : vector<2xf32> to vector<2x1xf32>
    %59 = vector.broadcast %58 : vector<2x1xf32> to vector<2x5xf32>
    %60 = arith.subf %56, %59 : vector<2x5xf32>
    %61 = math.exp %60 : vector<2x5xf32>
    %cst_16 = arith.constant dense<0.000000e+00> : vector<2xf32>
    %62 = vector.multi_reduction <add>, %61, %cst_16 [1] : vector<2x5xf32> to vector<2xf32>
    %63 = vector.shape_cast %62 : vector<2xf32> to vector<2x1xf32>
    %64 = vector.broadcast %63 : vector<2x1xf32> to vector<2x5xf32>
    %65 = arith.divf %61, %64 : vector<2x5xf32>
    %c0_17 = arith.constant 0 : index
    %c0_18 = arith.constant 0 : index
    %66 = vector.load %arg6[%c0_17, %c0_18] : memref<2x5xf32, #tpu.memory_space<vmem>>, vector<2x5xf32>
    tpu.vector_store %arg6[%c0_17, %c0_18], %65 {strides = array<i32>} : memref<2x5xf32, #tpu.memory_space<vmem>>, vector<2x5xf32>,
    return
  }
  func.func @transform_0(%arg0: i32) -> (i32, i32) {
    %c0_i32 = arith.constant 0 : i32
    %c0_i32_0 = arith.constant 0 : i32
    return %arg0, %c0_i32 : i32, i32
  }
  func.func @transform_1(%arg0: i32) -> (i32, i32) {
    %c0_i32 = arith.constant 0 : i32
    %c0_i32_0 = arith.constant 0 : i32
    %c0_i32_1 = arith.constant 0 : i32
    return %c0_i32, %c0_i32_0 : i32, i32
  }
  func.func @transform_2(%arg0: i32) -> (i32, i32, i32) {
    %c0_i32 = arith.constant 0 : i32
    %c0_i32_0 = arith.constant 0 : i32
    %c0_i32_1 = arith.constant 0 : i32
    %c0_i32_2 = arith.constant 0 : i32
    return %c0_i32, %c0_i32_0, %c0_i32_1 : i32, i32, i32
  }
  func.func @transform_3(%arg0: i32) -> (i32, i32) {
    %c0_i32 = arith.constant 0 : i32
    %c0_i32_0 = arith.constant 0 : i32
    %c0_i32_1 = arith.constant 0 : i32
    return %c0_i32, %c0_i32_0 : i32, i32
  }
  func.func @transform_4(%arg0: i32) -> (i32, i32) {
    %c0_i32 = arith.constant 0 : i32
    %c0_i32_0 = arith.constant 0 : i32
    %c0_i32_1 = arith.constant 0 : i32
    return %c0_i32, %c0_i32_0 : i32, i32
  }
  func.func @transform_5(%arg0: i32) -> (i32, i32) {
    %c0_i32 = arith.constant 0 : i32
    %c0_i32_0 = arith.constant 0 : i32
    return %arg0, %c0_i32 : i32, i32
  }
}

</mosaic_0001>

<llo_original>
// kernel: cnn_forward.1
$region0: #{cnn_forward.1}
  #allocation0 [shape = 'u32[]', space=smem, size = 0x4, offset = 0x4, fixed_abs, tag = 'smem constant byte address 0x4 - core index']
  #allocation1 [shape = 'u32[144,128]{1,0:T(1,128)}', space=vmem, size = 0x12000, scoped, tag = 'internal scratch']
  %s0 = inlined_call_operand.vmem [shape: bf16[32,512], index: 0, kind: input, shape index: {}]
  %s1 = inlined_call_operand.vmem [shape: bf16[512,110], index: 1, kind: input, shape index: {}]
  %s2 = inlined_call_operand.vmem [shape: f32[4,1,10], index: 2, kind: input, shape index: {}]
  %s3 = inlined_call_operand.vmem [shape: f32[40,5], index: 3, kind: input, shape index: {}]
  %s4 = inlined_call_operand.vmem [shape: f32[1,5], index: 4, kind: input, shape index: {}]
  %s5 = inlined_call_operand.hbm [shape: f32[2,5], index: 5, kind: output, shape index: {}]
  %s6 = sld [smem:[#allocation0]]
  $region30: #{cnn_forward.1} parent=0
    _
  %s8 = ssub.s32 1, %s6
  %s9 = scalar_select 0, %s8, %s6
  $region1: #{cnn_forward.1} parent=0
    #allocation2 [shape = 'u8[1024]{0}', space=vmem, size = 0x400, scoped, tag = 'output window, operand 0, single buffered']
    #allocation3 [shape = 's32[1]{0}', space=sflag, size = 0x4, scoped, tag = 'scoped memory for cnn_forward.1']
    %10 = vsyncpa [#allocation3], 0
    // Predicated region
    $region2: #{cnn_forward.1} parent=1 // pred_check
      _
    $region3: #{cnn_forward.1} parent=1 // pred_check_branch
      %12 = sbr.rel (0) target = $region5
    $region4: #{cnn_forward.1} parent=1 // pred_region
      _
    $region5: #{cnn_forward.1} parent=1 // pred_fallthru
      _
    // Predicated region
    $region6: #{cnn_forward.1} parent=1 // pred_check
      _
    $region7: #{cnn_forward.1} parent=1 // pred_check_branch
      %14 = sbr.rel (0) target = $region9
    $region8: #{cnn_forward.1} parent=1 // pred_region
      _
    $region9: #{cnn_forward.1} parent=1 // pred_fallthru
      _
    // Predicated region
    $region10: #{cnn_forward.1} parent=1 // pred_check
      _
    $region11: #{cnn_forward.1} parent=1 // pred_check_branch
      %16 = sbr.rel (0) target = $region13
    $region12: #{cnn_forward.1} parent=1 // pred_region
      _
    $region13: #{cnn_forward.1} parent=1 // pred_fallthru
      _
    // Predicated region
    $region14: #{cnn_forward.1} parent=1 // pred_check
      _
    $region15: #{cnn_forward.1} parent=1 // pred_check_branch
      %18 = sbr.rel (0) target = $region17
    $region16: #{cnn_forward.1} parent=1 // pred_region
      _
    $region17: #{cnn_forward.1} parent=1 // pred_fallthru
      _
    // Predicated region
    $region18: #{cnn_forward.1} parent=1 // pred_check
      _
    $region19: #{cnn_forward.1} parent=1 // pred_check_branch
      %20 = sbr.rel (0) target = $region21
    $region20: #{cnn_forward.1} parent=1 // pred_region
      _
    $region21: #{cnn_forward.1} parent=1 // pred_fallthru
      _
    %v22 = vld [vmem:[%s0] sm:$0xff]
    %v23 = vld [vmem:[%s0 + $0x8] sm:$0xff]
    %v24 = vld [vmem:[%s0 + $0x10] sm:$0xff]
    %v25 = vld [vmem:[%s0 + $0x18] sm:$0xff]
    %v26 = vld [vmem:[%s0 + $0x20] sm:$0xff]
    %v27 = vld [vmem:[%s0 + $0x28] sm:$0xff]
    %v28 = vld [vmem:[%s0 + $0x30] sm:$0xff]
    %v29 = vld [vmem:[%s0 + $0x38] sm:$0xff]
    %v30 = vld [vmem:[%s1] sm:$0xf]
    %v31 = vld [vmem:[%s1 + $0x4] sm:$0xf]
    %v32 = vld [vmem:[%s1 + $0x8] sm:$0xf]
    %v33 = vld [vmem:[%s1 + $0xc] sm:$0xf]
    %v34 = vld [vmem:[%s1 + $0x10] sm:$0xf]
    %v35 = vld [vmem:[%s1 + $0x14] sm:$0xf]
    %v36 = vld [vmem:[%s1 + $0x18] sm:$0xf]
    %v37 = vld [vmem:[%s1 + $0x1c] sm:$0xf]
    %v38 = vld [vmem:[%s1 + $0x20] sm:$0xf]
    %v39 = vld [vmem:[%s1 + $0x24] sm:$0xf]
    %v40 = vld [vmem:[%s1 + $0x28] sm:$0xf]
    %v41 = vld [vmem:[%s1 + $0x2c] sm:$0xf]
    %v42 = vld [vmem:[%s1 + $0x30] sm:$0xf]
    %v43 = vld [vmem:[%s1 + $0x34] sm:$0xf]
    %v44 = vld [vmem:[%s1 + $0x38] sm:$0xf]
    %v45 = vld [vmem:[%s1 + $0x3c] sm:$0xf]
    %v46 = vld [vmem:[%s1 + $0x40] sm:$0xf]
    %v47 = vld [vmem:[%s1 + $0x44] sm:$0xf]
    %v48 = vld [vmem:[%s1 + $0x48] sm:$0xf]
    %v49 = vld [vmem:[%s1 + $0x4c] sm:$0xf]
    %v50 = vld [vmem:[%s1 + $0x50] sm:$0xf]
    %v51 = vld [vmem:[%s1 + $0x54] sm:$0xf]
    %v52 = vld [vmem:[%s1 + $0x58] sm:$0xf]
    %v53 = vld [vmem:[%s1 + $0x5c] sm:$0xf]
    %v54 = vld [vmem:[%s1 + $0x60] sm:$0xf]
    %v55 = vld [vmem:[%s1 + $0x64] sm:$0xf]
    %v56 = vld [vmem:[%s1 + $0x68] sm:$0xf]
    %v57 = vld [vmem:[%s1 + $0x6c] sm:$0xf]
    %v58 = vld [vmem:[%s1 + $0x70] sm:$0xf]
    %v59 = vld [vmem:[%s1 + $0x74] sm:$0xf]
    %v60 = vld [vmem:[%s1 + $0x78] sm:$0xf]
    %v61 = vld [vmem:[%s1 + $0x7c] sm:$0xf]
    %v62 = vld [vmem:[%s1 + $0x80] sm:$0xf]
    %v63 = vld [vmem:[%s1 + $0x84] sm:$0xf]
    %v64 = vld [vmem:[%s1 + $0x88] sm:$0xf]
    %v65 = vld [vmem:[%s1 + $0x8c] sm:$0xf]
    %v66 = vld [vmem:[%s1 + $0x90] sm:$0xf]
    %v67 = vld [vmem:[%s1 + $0x94] sm:$0xf]
    %v68 = vld [vmem:[%s1 + $0x98] sm:$0xf]
    %v69 = vld [vmem:[%s1 + $0x9c] sm:$0xf]
    %v70 = vld [vmem:[%s1 + $0xa0] sm:$0xf]
    %v71 = vld [vmem:[%s1 + $0xa4] sm:$0xf]
    %v72 = vld [vmem:[%s1 + $0xa8] sm:$0xf]
    %v73 = vld [vmem:[%s1 + $0xac] sm:$0xf]
    %v74 = vld [vmem:[%s1 + $0xb0] sm:$0xf]
    %v75 = vld [vmem:[%s1 + $0xb4] sm:$0xf]
    %v76 = vld [vmem:[%s1 + $0xb8] sm:$0xf]
    %v77 = vld [vmem:[%s1 + $0xbc] sm:$0xf]
    %v78 = vld [vmem:[%s1 + $0xc0] sm:$0xf]
    %v79 = vld [vmem:[%s1 + $0xc4] sm:$0xf]
    %v80 = vld [vmem:[%s1 + $0xc8] sm:$0xf]
    %v81 = vld [vmem:[%s1 + $0xcc] sm:$0xf]
    %v82 = vld [vmem:[%s1 + $0xd0] sm:$0xf]
    %v83 = vld [vmem:[%s1 + $0xd4] sm:$0xf]
    %v84 = vld [vmem:[%s1 + $0xd8] sm:$0xf]
    %v85 = vld [vmem:[%s1 + $0xdc] sm:$0xf]
    %v86 = vld [vmem:[%s1 + $0xe0] sm:$0xf]
    %v87 = vld [vmem:[%s1 + $0xe4] sm:$0xf]
    %v88 = vld [vmem:[%s1 + $0xe8] sm:$0xf]
    %v89 = vld [vmem:[%s1 + $0xec] sm:$0xf]
    %v90 = vld [vmem:[%s1 + $0xf0] sm:$0xf]
    %v91 = vld [vmem:[%s1 + $0xf4] sm:$0xf]
    %v92 = vld [vmem:[%s1 + $0xf8] sm:$0xf]
    %v93 = vld [vmem:[%s1 + $0xfc] sm:$0xf]
    %v102 = vunpack.c.l.b16 %v22
    %v103 = vunpack.c.h.b16 %v22
    %v104 = vunpack.c.l.b16 %v23
    %v105 = vunpack.c.h.b16 %v23
    %v106 = vunpack.c.l.b16 %v24
    %v107 = vunpack.c.h.b16 %v24
    %v108 = vunpack.c.l.b16 %v25
    %v109 = vunpack.c.h.b16 %v25
    %v110 = vunpack.c.l.b16 %v26
    %v111 = vunpack.c.h.b16 %v26
    %v112 = vunpack.c.l.b16 %v27
    %v113 = vunpack.c.h.b16 %v27
    %v114 = vunpack.c.l.b16 %v28
    %v115 = vunpack.c.h.b16 %v28
    %v116 = vunpack.c.l.b16 %v29
    %v117 = vunpack.c.h.b16 %v29
    %v118 = vpack.c.b16 %v106, %v102
    %v119 = vpack.c.b16 %v107, %v103
    %v120 = vpack.c.b16 %v108, %v104
    %v121 = vpack.c.b16 %v109, %v105
    %v122 = vpack.c.b16 %v114, %v110
    %v123 = vpack.c.b16 %v115, %v111
    %v124 = vpack.c.b16 %v116, %v112
    %v125 = vpack.c.b16 %v117, %v113
    %v198 = vunpack.c.l.b16 %v30
    %v199 = vunpack.c.l.b16 %v31
    %v200 = vunpack.c.l.b16 %v32
    %v201 = vunpack.c.l.b16 %v33
    %v202 = vunpack.c.l.b16 %v34
    %v203 = vunpack.c.l.b16 %v35
    %v204 = vunpack.c.l.b16 %v36
    %v205 = vunpack.c.l.b16 %v37
    %v206 = vunpack.c.l.b16 %v38
    %v207 = vunpack.c.l.b16 %v39
    %v208 = vunpack.c.l.b16 %v40
    %v209 = vunpack.c.l.b16 %v41
    %v210 = vunpack.c.l.b16 %v42
    %v211 = vunpack.c.l.b16 %v43
    %v212 = vunpack.c.l.b16 %v44
    %v213 = vunpack.c.l.b16 %v45
    %v214 = vunpack.c.l.b16 %v46
    %v215 = vunpack.c.l.b16 %v47
    %v216 = vunpack.c.l.b16 %v48
    %v217 = vunpack.c.l.b16 %v49
    %v218 = vunpack.c.l.b16 %v50
    %v219 = vunpack.c.l.b16 %v51
    %v220 = vunpack.c.l.b16 %v52
    %v221 = vunpack.c.l.b16 %v53
    %v222 = vunpack.c.l.b16 %v54
    %v223 = vunpack.c.l.b16 %v55
    %v224 = vunpack.c.l.b16 %v56
    %v225 = vunpack.c.l.b16 %v57
    %v226 = vunpack.c.l.b16 %v58
    %v227 = vunpack.c.l.b16 %v59
    %v228 = vunpack.c.l.b16 %v60
    %v229 = vunpack.c.l.b16 %v61
    %v230 = vunpack.c.l.b16 %v62
    %v231 = vunpack.c.l.b16 %v63
    %v232 = vunpack.c.l.b16 %v64
    %v233 = vunpack.c.l.b16 %v65
    %v234 = vunpack.c.l.b16 %v66
    %v235 = vunpack.c.l.b16 %v67
    %v236 = vunpack.c.l.b16 %v68
    %v237 = vunpack.c.l.b16 %v69
    %v238 = vunpack.c.l.b16 %v70
    %v239 = vunpack.c.l.b16 %v71
    %v240 = vunpack.c.l.b16 %v72
    %v241 = vunpack.c.l.b16 %v73
    %v242 = vunpack.c.l.b16 %v74
    %v243 = vunpack.c.l.b16 %v75
    %v244 = vunpack.c.l.b16 %v76
    %v245 = vunpack.c.l.b16 %v77
    %v246 = vunpack.c.l.b16 %v78
    %v247 = vunpack.c.l.b16 %v79
    %v248 = vunpack.c.l.b16 %v80
    %v249 = vunpack.c.l.b16 %v81
    %v250 = vunpack.c.l.b16 %v82
    %v251 = vunpack.c.l.b16 %v83
    %v252 = vunpack.c.l.b16 %v84
    %v253 = vunpack.c.l.b16 %v85
    %v254 = vunpack.c.l.b16 %v86
    %v255 = vunpack.c.l.b16 %v87
    %v256 = vunpack.c.l.b16 %v88
    %v257 = vunpack.c.l.b16 %v89
    %v258 = vunpack.c.l.b16 %v90
    %v259 = vunpack.c.l.b16 %v91
    %v260 = vunpack.c.l.b16 %v92
    %v261 = vunpack.c.l.b16 %v93
    %v262 = vpack.c.b16 %v199, %v198
    %v263 = vpack.c.b16 %v201, %v200
    %v264 = vpack.c.b16 %v203, %v202
    %v265 = vpack.c.b16 %v205, %v204
    %v266 = vpack.c.b16 %v207, %v206
    %v267 = vpack.c.b16 %v209, %v208
    %v268 = vpack.c.b16 %v211, %v210
    %v269 = vpack.c.b16 %v213, %v212
    %v270 = vpack.c.b16 %v215, %v214
    %v271 = vpack.c.b16 %v217, %v216
    %v272 = vpack.c.b16 %v219, %v218
    %v273 = vpack.c.b16 %v221, %v220
    %v274 = vpack.c.b16 %v223, %v222
    %v275 = vpack.c.b16 %v225, %v224
    %v276 = vpack.c.b16 %v227, %v226
    %v277 = vpack.c.b16 %v229, %v228
    %v278 = vpack.c.b16 %v231, %v230
    %v279 = vpack.c.b16 %v233, %v232
    %v280 = vpack.c.b16 %v235, %v234
    %v281 = vpack.c.b16 %v237, %v236
    %v282 = vpack.c.b16 %v239, %v238
    %v283 = vpack.c.b16 %v241, %v240
    %v284 = vpack.c.b16 %v243, %v242
    %v285 = vpack.c.b16 %v245, %v244
    %v286 = vpack.c.b16 %v247, %v246
    %v287 = vpack.c.b16 %v249, %v248
    %v288 = vpack.c.b16 %v251, %v250
    %v289 = vpack.c.b16 %v253, %v252
    %v290 = vpack.c.b16 %v255, %v254
    %v291 = vpack.c.b16 %v257, %v256
    %v292 = vpack.c.b16 %v259, %v258
    %v293 = vpack.c.b16 %v261, %v260
    %326 = vmatprep.subr.bf16.mxu0 0
    %327 = vmatpush1.bf16.msra.mxu0 %v262
    %328 = vmatprep.subr.bf16.mxu0 0
    %329 = vmatpush1.bf16.msra.mxu0 %v263
    %330 = vmatprep.subr.bf16.mxu0 0
    %331 = vmatpush1.bf16.msra.mxu0 %v264
    %332 = vmatprep.subr.bf16.mxu0 0
    %333 = vmatpush1.bf16.msra.mxu0 %v265
    %334 = vmatprep.subr.bf16.mxu0 0
    %335 = vmatpush1.bf16.msra.mxu0 %v266
    %336 = vmatprep.subr.bf16.mxu0 0
    %337 = vmatpush1.bf16.msra.mxu0 %v267
    %338 = vmatprep.subr.bf16.mxu0 0
    %339 = vmatpush1.bf16.msra.mxu0 %v268
    %340 = vmatprep.subr.bf16.mxu0 0
    %341 = vmatpush1.bf16.msra.mxu0 %v269
    %342 = vmatprep.subr.bf16.mxu0 0
    %343 = vmatpush1.bf16.msra.mxu0 %v270
    %344 = vmatprep.subr.bf16.mxu0 0
    %345 = vmatpush1.bf16.msra.mxu0 %v271
    %346 = vmatprep.subr.bf16.mxu0 0
    %347 = vmatpush1.bf16.msra.mxu0 %v272
    %348 = vmatprep.subr.bf16.mxu0 0
    %349 = vmatpush1.bf16.msra.mxu0 %v273
    %350 = vmatprep.subr.bf16.mxu0 0
    %351 = vmatpush1.bf16.msra.mxu0 %v274
    %352 = vmatprep.subr.bf16.mxu0 0
    %353 = vmatpush1.bf16.msra.mxu0 %v275
    %354 = vmatprep.subr.bf16.mxu0 0
    %355 = vmatpush1.bf16.msra.mxu0 %v276
    %356 = vmatprep.subr.bf16.mxu0 0
    %357 = vmatpush1.bf16.msra.mxu0 %v277
    %358 = vmatprep.mubr.bf16.mxu0 %v119
    %359 = vmatmul.mubr.bf16.gmra.mrb[0].mxu0 %v118
    %v360 = vpop.f32.mrb[0].mxu0
    %v361 = vadd.f32 0.0, %v360
    %v362 = vpop.f32.mrb[0].mxu0
    %v363 = vpop.f32.mrb[0].mxu0
    %v364 = vadd.f32 0.0, %v363
    %v365 = vpop.f32.mrb[0].mxu0
    %366 = vmatprep.mubr.bf16.mxu0 %v123
    %367 = vmatmul.mubr.bf16.gmra.mrb[0].mxu0 %v122
    %v368 = vpop.f32.mrb[0].mxu0
    %v369 = vadd.f32 0.0, %v368
    %v370 = vpop.f32.mrb[0].mxu0
    %v371 = vpop.f32.mrb[0].mxu0
    %v372 = vadd.f32 0.0, %v371
    %v373 = vpop.f32.mrb[0].mxu0
    %374 = vdwg.mxu0
    %375 = vmatprep.subr.bf16.mxu0 0
    %376 = vmatpush1.bf16.msra.mxu0 %v278
    %377 = vmatprep.subr.bf16.mxu0 0
    %378 = vmatpush1.bf16.msra.mxu0 %v279
    %379 = vmatprep.subr.bf16.mxu0 0
    %380 = vmatpush1.bf16.msra.mxu0 %v280
    %381 = vmatprep.subr.bf16.mxu0 0
    %382 = vmatpush1.bf16.msra.mxu0 %v281
    %383 = vmatprep.subr.bf16.mxu0 0
    %384 = vmatpush1.bf16.msra.mxu0 %v282
    %385 = vmatprep.subr.bf16.mxu0 0
    %386 = vmatpush1.bf16.msra.mxu0 %v283
    %387 = vmatprep.subr.bf16.mxu0 0
    %388 = vmatpush1.bf16.msra.mxu0 %v284
    %389 = vmatprep.subr.bf16.mxu0 0
    %390 = vmatpush1.bf16.msra.mxu0 %v285
    %391 = vmatprep.subr.bf16.mxu0 0
    %392 = vmatpush1.bf16.msra.mxu0 %v286
    %393 = vmatprep.subr.bf16.mxu0 0
    %394 = vmatpush1.bf16.msra.mxu0 %v287
    %395 = vmatprep.subr.bf16.mxu0 0
    %396 = vmatpush1.bf16.msra.mxu0 %v288
    %397 = vmatprep.subr.bf16.mxu0 0
    %398 = vmatpush1.bf16.msra.mxu0 %v289
    %399 = vmatprep.subr.bf16.mxu0 0
    %400 = vmatpush1.bf16.msra.mxu0 %v290
    %401 = vmatprep.subr.bf16.mxu0 0
    %402 = vmatpush1.bf16.msra.mxu0 %v291
    %403 = vmatprep.subr.bf16.mxu0 0
    %404 = vmatpush1.bf16.msra.mxu0 %v292
    %405 = vmatprep.subr.bf16.mxu0 0
    %406 = vmatpush1.bf16.msra.mxu0 %v293
    %407 = vmatprep.mubr.bf16.mxu0 %v121
    %408 = vmatmul.mubr.bf16.gmra.mrb[0].mxu0 %v120
    %v409 = vpop.f32.mrb[0].mxu0
    %v410 = vadd.f32 %v361, %v409
    %v411 = vpop.f32.mrb[0].mxu0
    %v412 = vpop.f32.mrb[0].mxu0
    %v413 = vadd.f32 %v364, %v412
    %v414 = vpop.f32.mrb[0].mxu0
    %415 = vmatprep.mubr.bf16.mxu0 %v125
    %416 = vmatmul.mubr.bf16.gmra.mrb[0].mxu0 %v124
    %v417 = vpop.f32.mrb[0].mxu0
    %v418 = vadd.f32 %v369, %v417
    %v419 = vpop.f32.mrb[0].mxu0
    %v420 = vpop.f32.mrb[0].mxu0
    %v421 = vadd.f32 %v372, %v420
    %v422 = vpop.f32.mrb[0].mxu0
    %423 = vdwg.mxu0
    %v424 = vld [vmem:[%s2] sm:$0x1]
    %v425 = vld [vmem:[%s2 + $0x1] sm:$0x1]
    %v426 = vld [vmem:[%s2 + $0x2] sm:$0x1]
    %v427 = vld [vmem:[%s2 + $0x3] sm:$0x1]
    %v429 = vlaneseq
    %v430 = vshrl.u32 %v429, 7
    %v431 = vsub.s32 0, %v430
    %v432 = vrot.slane %v424, %v431
    %v434 = vadd.f32 %v410, %v432
    %v435 = vadd.f32 %v413, %v432
    %v436 = vadd.f32 %v418, %v432
    %v437 = vadd.f32 %v421, %v432
    %v438 = vtanh.pop %v434
    %v439 = vtanh.pop %v435
    %v440 = vtanh.pop %v436
    %v441 = vtanh.pop %v437
    %vm442 = vcmask 80900
    %v443 = vsel %vm442, %v438, -inf
    %vm444 = vcmask 76800
    %v445 = vsel %vm444, %v439, -inf
    %v446 = vmax.f32 %v443, %v445
    %v447 = vrot.slane %v446, 4
    %v448 = vmax.f32 %v446, %v447
    %v449 = vrot.slane %v448, 2
    %v450 = vmax.f32 %v448, %v449
    %v451 = vrot.slane %v450, 1
    %v452 = vmax.f32 %v450, %v451
    %v453 = vsel %vm442, %v440, -inf
    %v454 = vsel %vm444, %v441, -inf
    %v455 = vmax.f32 %v453, %v454
    %v456 = vrot.slane %v455, 4
    %v457 = vmax.f32 %v455, %v456
    %v458 = vrot.slane %v457, 2
    %v459 = vmax.f32 %v457, %v458
    %v460 = vrot.slane %v459, 1
    %v461 = vmax.f32 %v459, %v460
    %vm466 = vcmask 1046528
    %v467 = vrot.slane %v410, 1
    %v468 = vrot.slane %v413, 1
    %v469 = vsel %vm466, %v467, %v468
    %v470 = vrot.slane %v418, 1
    %v471 = vrot.slane %v421, 1
    %v472 = vsel %vm466, %v470, %v471
    %473 = vrot.lane.b32.xlu0 %v469, 118
    %v474 = vpop.permute.xlu0 %473
    %475 = vrot.lane.b32.xlu0 %v468, 118
    %v476 = vpop.permute.xlu0 %475
    %477 = vrot.lane.b32.xlu0 %v472, 118
    %v478 = vpop.permute.xlu0 %477
    %479 = vrot.lane.b32.xlu0 %v471, 118
    %v480 = vpop.permute.xlu0 %479
    %v485 = vadd.f32 %v410, %v474
    %v486 = vadd.f32 %v413, %v476
    %v487 = vadd.f32 %v418, %v478
    %v488 = vadd.f32 %v421, %v480
    %v490 = vlaneseq
    %v491 = vshrl.u32 %v490, 7
    %v492 = vsub.s32 0, %v491
    %v493 = vrot.slane %v425, %v492
    %494 = vrot.lane.b32.xlu0 %v493, 10
    %v495 = vpop.permute.xlu0 %494
    %v497 = vadd.f32 %v485, %v495
    %v498 = vadd.f32 %v486, %v495
    %v499 = vadd.f32 %v487, %v495
    %v500 = vadd.f32 %v488, %v495
    %v501 = vtanh.pop %v497
    %v502 = vtanh.pop %v498
    %v503 = vtanh.pop %v499
    %v504 = vtanh.pop %v500
    %vm505 = vcmask 162899
    %v506 = vsel %vm505, %v501, -inf
    %vm507 = vcmask 158800
    %v508 = vsel %vm507, %v502, -inf
    %v509 = vmax.f32 %v506, %v508
    %v510 = vrot.slane %v509, 4
    %v511 = vmax.f32 %v509, %v510
    %v512 = vrot.slane %v511, 2
    %v513 = vmax.f32 %v511, %v512
    %v514 = vrot.slane %v513, 1
    %v515 = vmax.f32 %v513, %v514
    %v516 = vsel %vm505, %v503, -inf
    %v517 = vsel %vm507, %v504, -inf
    %v518 = vmax.f32 %v516, %v517
    %v519 = vrot.slane %v518, 4
    %v520 = vmax.f32 %v518, %v519
    %v521 = vrot.slane %v520, 2
    %v522 = vmax.f32 %v520, %v521
    %v523 = vrot.slane %v522, 1
    %v524 = vmax.f32 %v522, %v523
    %vm525 = vcmask 1045504
    %v526 = vrot.slane %v410, 2
    %v527 = vrot.slane %v413, 2
    %v528 = vsel %vm525, %v526, %v527
    %v529 = vrot.slane %v418, 2
    %v530 = vrot.slane %v421, 2
    %v531 = vsel %vm525, %v529, %v530
    %532 = vrot.lane.b32.xlu0 %v528, 108
    %v533 = vpop.permute.xlu0 %532
    %534 = vrot.lane.b32.xlu0 %v527, 108
    %v535 = vpop.permute.xlu0 %534
    %536 = vrot.lane.b32.xlu0 %v531, 108
    %v537 = vpop.permute.xlu0 %536
    %538 = vrot.lane.b32.xlu0 %v530, 108
    %v539 = vpop.permute.xlu0 %538
    %v544 = vadd.f32 %v485, %v533
    %v545 = vadd.f32 %v486, %v535
    %v546 = vadd.f32 %v487, %v537
    %v547 = vadd.f32 %v488, %v539
    %v549 = vlaneseq
    %v550 = vshrl.u32 %v549, 7
    %v551 = vsub.s32 0, %v550
    %v552 = vrot.slane %v426, %v551
    %553 = vrot.lane.b32.xlu0 %v552, 30
    %v554 = vpop.permute.xlu0 %553
    %v556 = vadd.f32 %v544, %v554
    %v557 = vadd.f32 %v545, %v554
    %v558 = vadd.f32 %v546, %v554
    %v559 = vadd.f32 %v547, %v554
    %v560 = vtanh.pop %v556
    %v561 = vtanh.pop %v557
    %v562 = vtanh.pop %v558
    %v563 = vtanh.pop %v559
    %vm564 = vcmask 326898
    %v565 = vsel %vm564, %v560, -inf
    %vm566 = vcmask 322800
    %v567 = vsel %vm566, %v561, -inf
    %v568 = vmax.f32 %v565, %v567
    %v569 = vrot.slane %v568, 4
    %v570 = vmax.f32 %v568, %v569
    %v571 = vrot.slane %v570, 2
    %v572 = vmax.f32 %v570, %v571
    %v573 = vrot.slane %v572, 1
    %v574 = vmax.f32 %v572, %v573
    %v575 = vsel %vm564, %v562, -inf
    %v576 = vsel %vm566, %v563, -inf
    %v577 = vmax.f32 %v575, %v576
    %v578 = vrot.slane %v577, 4
    %v579 = vmax.f32 %v577, %v578
    %v580 = vrot.slane %v579, 2
    %v581 = vmax.f32 %v579, %v580
    %v582 = vrot.slane %v581, 1
    %v583 = vmax.f32 %v581, %v582
    %vm584 = vcmask 1044480
    %v585 = vrot.slane %v410, 3
    %v586 = vrot.slane %v413, 3
    %v587 = vsel %vm584, %v585, %v586
    %v588 = vrot.slane %v418, 3
    %v589 = vrot.slane %v421, 3
    %v590 = vsel %vm584, %v588, %v589
    %591 = vrot.lane.b32.xlu0 %v587, 98
    %v592 = vpop.permute.xlu0 %591
    %593 = vrot.lane.b32.xlu0 %v586, 98
    %v594 = vpop.permute.xlu0 %593
    %595 = vrot.lane.b32.xlu0 %v590, 98
    %v596 = vpop.permute.xlu0 %595
    %597 = vrot.lane.b32.xlu0 %v589, 98
    %v598 = vpop.permute.xlu0 %597
    %v603 = vadd.f32 %v544, %v592
    %v604 = vadd.f32 %v545, %v594
    %v605 = vadd.f32 %v546, %v596
    %v606 = vadd.f32 %v547, %v598
    %vm607 = vcmask 1043456
    %v608 = vrot.slane %v410, 4
    %v609 = vrot.slane %v413, 4
    %v610 = vsel %vm607, %v608, %v609
    %v611 = vrot.slane %v418, 4
    %v612 = vrot.slane %v421, 4
    %v613 = vsel %vm607, %v611, %v612
    %614 = vrot.lane.b32.xlu0 %v610, 88
    %v615 = vpop.permute.xlu0 %614
    %616 = vrot.lane.b32.xlu0 %v609, 88
    %v617 = vpop.permute.xlu0 %616
    %618 = vrot.lane.b32.xlu0 %v613, 88
    %v619 = vpop.permute.xlu0 %618
    %620 = vrot.lane.b32.xlu0 %v612, 88
    %v621 = vpop.permute.xlu0 %620
    %v626 = vadd.f32 %v603, %v615
    %v627 = vadd.f32 %v604, %v617
    %v628 = vadd.f32 %v605, %v619
    %v629 = vadd.f32 %v606, %v621
    %v631 = vlaneseq
    %v632 = vshrl.u32 %v631, 7
    %v633 = vsub.s32 0, %v632
    %v634 = vrot.slane %v427, %v633
    %635 = vrot.lane.b32.xlu0 %v634, 60
    %v636 = vpop.permute.xlu0 %635
    %v638 = vadd.f32 %v626, %v636
    %v639 = vadd.f32 %v627, %v636
    %v640 = vadd.f32 %v628, %v636
    %v641 = vadd.f32 %v629, %v636
    %v642 = vtanh.pop %v638
    %v643 = vtanh.pop %v639
    %v644 = vtanh.pop %v640
    %v645 = vtanh.pop %v641
    %vm646 = vcmask 572896
    %v647 = vsel %vm646, %v642, -inf
    %vm648 = vcmask 568800
    %v649 = vsel %vm648, %v643, -inf
    %v650 = vmax.f32 %v647, %v649
    %v651 = vrot.slane %v650, 4
    %v652 = vmax.f32 %v650, %v651
    %v653 = vrot.slane %v652, 2
    %v654 = vmax.f32 %v652, %v653
    %v655 = vrot.slane %v654, 1
    %v656 = vmax.f32 %v654, %v655
    %v657 = vsel %vm646, %v644, -inf
    %v658 = vsel %vm648, %v645, -inf
    %v659 = vmax.f32 %v657, %v658
    %v660 = vrot.slane %v659, 4
    %v661 = vmax.f32 %v659, %v660
    %v662 = vrot.slane %v661, 2
    %v663 = vmax.f32 %v661, %v662
    %v664 = vrot.slane %v663, 1
    %v665 = vmax.f32 %v663, %v664
    %vm668 = vcmask 1041409
    %v669 = vsel %vm668, %v461, %v452
    %v673 = vsel %vm668, %v524, %v515
    %v677 = vsel %vm668, %v583, %v574
    %678 = vrot.lane.b32.xlu0 %v677, 118
    %v679 = vpop.permute.xlu0 %678
    %v683 = vsel %vm668, %v665, %v656
    %684 = vrot.lane.b32.xlu0 %v683, 98
    %v685 = vpop.permute.xlu0 %684
    %vm687 = vcmask 80896
    %v688 = vsel %vm687, %v669, %v673
    %vm689 = vcmask 162816
    %v690 = vsel %vm689, %v688, %v679
    %vm691 = vcmask 244736
    %v692 = vsel %vm691, %v690, %v685
    %v693 = vld [vmem:[%s3] sm:$0xff]
    %v694 = vld [vmem:[%s3 + $0x8] sm:$0xff]
    %v695 = vld [vmem:[%s3 + $0x10] sm:$0xff]
    %v696 = vld [vmem:[%s3 + $0x18] sm:$0xff]
    %v697 = vld [vmem:[%s3 + $0x20] sm:$0xff]
    %v698 = vld [vmem:[%s4] sm:$0x1]
    %v700 = vlaneseq
    %v701 = vshrl.u32 %v700, 7
    %v702 = vsub.s32 0, %v701
    %v703 = vrot.slane %v698, %v702
    %vm705 = vcmask 326656
    %v707 = vsel %vm705, %v692, 0
    %709 = vmatprep.subr.mxu0 0.0
    %710 = vmatpush1.msra.mxu0 %v693
    %711 = vmatprep.subr.mxu0 0.0
    %712 = vmatpush1.msra.mxu0 %v694
    %713 = vmatprep.subr.mxu0 0.0
    %714 = vmatpush1.msra.mxu0 %v695
    %715 = vmatprep.subr.mxu0 0.0
    %716 = vmatpush1.msra.mxu0 %v696
    %717 = vmatprep.subr.mxu0 0.0
    %718 = vmatpush1.msra.mxu0 %v697
    %719 = vmatprep.subr.mxu0 0.0
    %720 = vmatpush1.msra.mxu0 0.0
    %721 = vmatprep.subr.mxu0 0.0
    %722 = vmatpush1.msra.mxu0 0.0
    %723 = vmatprep.subr.mxu0 0.0
    %724 = vmatpush1.msra.mxu0 0.0
    %725 = vmatprep.subr.mxu0 0.0
    %726 = vmatpush1.msra.mxu0 0.0
    %727 = vmatprep.subr.mxu0 0.0
    %728 = vmatpush1.msra.mxu0 0.0
    %729 = vmatprep.subr.mxu0 0.0
    %730 = vmatpush1.msra.mxu0 0.0
    %731 = vmatprep.subr.mxu0 0.0
    %732 = vmatpush1.msra.mxu0 0.0
    %733 = vmatprep.subr.mxu0 0.0
    %734 = vmatpush1.msra.mxu0 0.0
    %735 = vmatprep.subr.mxu0 0.0
    %736 = vmatpush1.msra.mxu0 0.0
    %737 = vmatprep.subr.mxu0 0.0
    %738 = vmatpush1.msra.mxu0 0.0
    %739 = vmatprep.subr.mxu0 0.0
    %740 = vmatpush1.msra.mxu0 0.0
    %741 = vmatprep.subr.mxu0 0.0
    %742 = vmatpush1.msra.mxu0 0.0
    %743 = vmatprep.subr.mxu0 0.0
    %744 = vmatpush1.msra.mxu0 0.0
    %745 = vmatprep.subr.mxu0 0.0
    %746 = vmatpush1.msra.mxu0 0.0
    %747 = vmatprep.subr.mxu0 0.0
    %748 = vmatpush1.msra.mxu0 0.0
    %749 = vmatprep.subr.mxu0 0.0
    %750 = vmatpush1.msra.mxu0 0.0
    %751 = vmatprep.subr.mxu0 0.0
    %752 = vmatpush1.msra.mxu0 0.0
    %753 = vmatprep.subr.mxu0 0.0
    %754 = vmatpush1.msra.mxu0 0.0
    %755 = vmatprep.subr.mxu0 0.0
    %756 = vmatpush1.msra.mxu0 0.0
    %757 = vmatprep.subr.mxu0 0.0
    %758 = vmatpush1.msra.mxu0 0.0
    %759 = vmatprep.subr.mxu0 0.0
    %760 = vmatpush1.msra.mxu0 0.0
    %761 = vmatprep.subr.mxu0 0.0
    %762 = vmatpush1.msra.mxu0 0.0
    %763 = vmatprep.subr.mxu0 0.0
    %764 = vmatpush1.msra.mxu0 0.0
    %765 = vmatprep.subr.mxu0 0.0
    %766 = vmatpush1.msra.mxu0 0.0
    %767 = vmatprep.subr.mxu0 0.0
    %768 = vmatpush1.msra.mxu0 0.0
    %769 = vmatprep.subr.mxu0 0.0
    %770 = vmatpush1.msra.mxu0 0.0
    %771 = vmatprep.subr.mxu0 0.0
    %772 = vmatpush1.msra.mxu0 0.0
    %773 = vmatprep.mubr.f32.mxu0 0.0
    %774 = vmatmul.mubr.f32.gmra.mrb[0].mxu0 %v707
    %v775 = vpop.f32.mrb[0].mxu0
    %v776 = vadd.f32 %v703, %v775
    %v777 = vpop.f32.mrb[0].mxu0
    %778 = vdwg.mxu0
    %vm779 = vcmask 33792
    %v780 = vsel %vm779, %v776, -inf
    %781 = vmax.xlane.f32.xlu0 %v780
    %v782 = vpop.xlane.xlu0 %781
    %v783 = vsub.f32 %v776, %v782
    %v784 = vmul.f32 %v783, 1.442695
    %v785 = vpow.pop %v784
    %v786 = vsel %vm779, %v785, 0.0
    %787 = vadd.xlane.f32.xlu0 %v786
    %v788 = vpop.xlane.xlu0 %787
    %v789 = vrcp.pop %v788
    %v790 = vmul.f32 %v785, %v789
    %791 = vst.msk [vmem:[#allocation2] sm:$0x3] %vm779, %v790
    // Predicated region
    $region22: #{cnn_forward.1} parent=1 // pred_check
      _
    $region23: #{cnn_forward.1} parent=1 // pred_check_branch
      %793 = sbr.rel (0) target = $region25
    $region24: #{cnn_forward.1} parent=1 // pred_region
      %s795 = ssub.s32 32, 32
      %796 = vsyncadd [#allocation3], %s795
      %s798 = sshll.u32 [#allocation2], 4
      %s799 = int_to_ptr.vmem [resolvable:$true] %s798
      %801 = dma.vmem_to_hbm [thread:$0]  %s799, 32, %s5, [#allocation3]
    $region25: #{cnn_forward.1} parent=1 // pred_fallthru
      _
    // Predicated region
    $region26: #{cnn_forward.1} parent=1 // pred_check
      _
    $region27: #{cnn_forward.1} parent=1 // pred_check_branch
      %803 = sbr.rel (0) target = $region29
    $region28: #{cnn_forward.1} parent=1 // pred_region
      %804 = dma.done [#allocation3], 32
    $region29: #{cnn_forward.1} parent=1 // pred_fallthru
      _
    %805 = vsyncpa [#allocation3], 1

</llo_original>
